<compile_context>
chip_gen: v6e
topology: v6e:2x2x1
jax: 0.10.0
libtpu: 0.0.40
codegen_flags: <defaults>
</compile_context>

<pallas_src>
import jax
import jax.numpy as jnp
from jax.experimental import pallas as pl
from jax.experimental.pallas import tpu as pltpu


def _shared_qk_head_kernel(x_ref, wq_ref, bq_ref, wv_ref, bv_ref,
                           wo_ref, bo_ref, o_ref, acc_ref):
    h = pl.program_id(1)
    x = x_ref[0]                       # (n, d_in), native dtype (f32 or bf16)
    cdt = x.dtype                      # MXU operand dtype; accumulation is f32

    # Per-head q/v projections; no operand upcast, f32 accumulation on the MXU.
    # (The dh**-0.25 attention scale is already folded into wq / bq.)
    q = jnp.dot(x, wq_ref[0], preferred_element_type=jnp.float32) + bq_ref[0]
    v = jnp.dot(x, wv_ref[0], preferred_element_type=jnp.float32) + bv_ref[0]

    # Shared-QK scores: s = (c*q) @ (c*q)^T == q @ q^T / sqrt(dh).
    qc = q.astype(cdt)
    s = jax.lax.dot_general(qc, qc, (((1,), (1,)), ((), ())),
                            preferred_element_type=jnp.float32)      # (n, n)

    # f32 softmax; normalization deferred past the P@V matmul.
    m = jnp.max(s, axis=-1, keepdims=True)
    p = jnp.exp(s - m)
    l = jnp.sum(p, axis=-1, keepdims=True)                           # (n, 1)

    o = jnp.dot(p.astype(cdt), v.astype(cdt),
                preferred_element_type=jnp.float32)                  # (n, dh)
    inv = pl.reciprocal(l, approx=True)      # EUP slot, off the VALU path
    inv = inv * (2.0 - l * inv)              # one Newton step -> near-exact
    o = o * inv

    # This head's slice of the output projection, accumulated over heads.
    contrib = jnp.dot(o.astype(cdt), wo_ref[0],
                      preferred_element_type=jnp.float32)            # (n, d_out)

    @pl.when(h == 0)
    def _init():
        acc_ref[...] = contrib + bo_ref[...].astype(jnp.float32)

    @pl.when(h != 0)
    def _accumulate():
        acc_ref[...] = acc_ref[...] + contrib

    @pl.when(h == pl.num_programs(1) - 1)
    def _finalize():
        o_ref[0] = acc_ref[...].astype(o_ref.dtype)


def shared_qk_mhsa(x, wqv, bqv, wo, bo, *, num_heads, merge_type="concat"):
    """Shared-QK multi-head self-attention.

    x:   (b, n, d_in)
    wqv: (d_in, 2*d_model)  qv projection (y = x @ wqv + bqv)
    bqv: (1, 2*d_model)
    wo:  (merge_dim, d_in)  merge_dim = d_model ('concat') or d_model//H ('mean')
    bo:  (1, d_in)
    """
    b, n, d_in = x.shape
    two_dm = wqv.shape[1]
    dm = two_dm // 2
    H = num_heads
    assert dm % H == 0, "d_model must be divisible by num_heads"
    dh = dm // H
    d_out = wo.shape[1]
    assert wo.shape[0] == (dh if merge_type == "mean" else dm)

    # ---- one-time host-side weight restructuring (pure layout + scale fold) ----
    # qv column f belongs to head f // (2*dh); within a head the first dh
    # columns are q, the last dh are v (matches rearrange + chunk in PyTorch).
    c = float(dh) ** -0.25                  # (c*q)(c*q)^T == q q^T / sqrt(dh)
    wqv4 = wqv.reshape(d_in, H, 2, dh)
    bqv3 = jnp.reshape(bqv, (H, 2, dh))
    wq3 = jnp.transpose(wqv4[:, :, 0, :], (1, 0, 2)) * c     # (H, d_in, dh)
    wv3 = jnp.transpose(wqv4[:, :, 1, :], (1, 0, 2))         # (H, d_in, dh)
    bq3 = (bqv3[:, 0, :] * c).reshape(H, 1, dh)              # (H, 1, dh)
    bv3 = bqv3[:, 1, :].reshape(H, 1, dh)                    # (H, 1, dh)
    if merge_type == "mean":
        # mean over heads == sum over heads with wo / H.  One shared block,
        # constant index_map -> DMA'd once (no H-fold duplication).
        wo3 = (wo / H)[None]                                 # (1, dh, d_out)
        wo_map = lambda i, h: (0, 0, 0)
    else:
        wo3 = wo.reshape(H, dh, d_out)                       # (H, dh, d_out)
        wo_map = lambda i, h: (h, 0, 0)
    bo2 = jnp.reshape(bo, (1, d_out))

    return pl.pallas_call(
        _shared_qk_head_kernel,
        out_shape=jax.ShapeDtypeStruct((b, n, d_out), x.dtype),
        grid=(b, H),                         # heads innermost (reduction axis)
        in_specs=[
            # x block is constant across the head axis -> DMA'd once per batch elem.
            pl.BlockSpec((1, n, d_in), lambda i, h: (i, 0, 0)),
            pl.BlockSpec((1, d_in, dh), lambda i, h: (h, 0, 0)),   # wq (per head)
            pl.BlockSpec((1, 1, dh), lambda i, h: (h, 0, 0)),      # bq
            pl.BlockSpec((1, d_in, dh), lambda i, h: (h, 0, 0)),   # wv
            pl.BlockSpec((1, 1, dh), lambda i, h: (h, 0, 0)),      # bv
            pl.BlockSpec((1, dh, d_out), wo_map),                  # wo
            pl.BlockSpec((1, d_out), lambda i, h: (0, 0)),         # bo
        ],
        out_specs=pl.BlockSpec((1, n, d_out), lambda i, h: (i, 0, 0)),
        scratch_shapes=[pltpu.VMEM((n, d_out), jnp.float32)],
        compiler_params=pltpu.CompilerParams(
            dimension_semantics=("parallel", "arbitrary"),
            vmem_limit_bytes=48 * 1024 * 1024,   # explicit, v7x-safe budget
        ),
    )(x, wq3, bq3, wv3, bv3, wo3, bo2)


def _reference(x, wqv, bqv, wo, bo, *, num_heads, merge_type="concat"):
    """Pure-JAX reference mirroring the PyTorch forward (HIGHEST precision)."""
    hp = jax.lax.Precision.HIGHEST
    b, n, d_in = x.shape
    qv = jnp.einsum("bnd,de->bne", x, wqv, precision=hp) + jnp.reshape(bqv, (-1,))
    two_dm = qv.shape[-1]
    dh2 = two_dm // num_heads
    dh = dh2 // 2
    qv = qv.reshape(b, n, num_heads, dh2).transpose(0, 2, 1, 3)    # b h n (2*dh)
    q, v = qv[..., :dh], qv[..., dh:]
    attn = jnp.einsum("bhnd,bhmd->bhnm", q, q, precision=hp) / (dh ** 0.5)
    attn = jax.nn.softmax(attn, axis=-1)
    out = jnp.einsum("bhnm,bhmd->bhnd", attn, v, precision=hp)     # b h n dh
    if merge_type == "mean":
        merged = out.mean(axis=1)
    else:
        merged = out.transpose(0, 2, 1, 3).reshape(b, n, num_heads * dh)
    return jnp.einsum("bnd,de->bne", merged, wo, precision=hp) + jnp.reshape(bo, (-1,))


if __name__ == "__main__":
    # Small, module-consistent shapes.
    batch, seq, d_model = 2, 8, 32
    num_heads = 4
    bottleneck_ratio = 1

    d_in = d_model
    d_b = d_model // bottleneck_ratio     # bottleneck width (qv -> 2*d_b features)
    dh = d_b // num_heads

    key = jax.random.PRNGKey(0)
    kx, k1, k2, k3, k4, k5, k6 = jax.random.split(key, 7)

    x = jax.random.normal(kx, (batch, seq, d_in), dtype=jnp.float32)

    # Deterministic nn.Linear-style init (uniform +/- 1/sqrt(fan_in)).
    lim_qv = 1.0 / (d_in ** 0.5)
    wqv = jax.random.uniform(k1, (d_in, 2 * d_b), jnp.float32, -lim_qv, lim_qv)
    bqv = jax.random.uniform(k2, (1, 2 * d_b), jnp.float32, -lim_qv, lim_qv)

    # --- 'concat' merge ---
    lim_o = 1.0 / (d_b ** 0.5)
    wo_c = jax.random.uniform(k3, (d_b, d_in), jnp.float32, -lim_o, lim_o)
    bo_c = jax.random.uniform(k4, (1, d_in), jnp.float32, -lim_o, lim_o)
    out_c = jax.block_until_ready(
        shared_qk_mhsa(x, wqv, bqv, wo_c, bo_c,
                       num_heads=num_heads, merge_type="concat"))
    ref_c = _reference(x, wqv, bqv, wo_c, bo_c,
                       num_heads=num_heads, merge_type="concat")
    assert out_c.shape == (batch, seq, d_in)
    assert jnp.allclose(out_c, ref_c, atol=1e-3, rtol=1e-3), "concat mismatch"

    # --- 'mean' merge ---
    lim_m = 1.0 / (dh ** 0.5)
    wo_m = jax.random.uniform(k5, (dh, d_in), jnp.float32, -lim_m, lim_m)
    bo_m = jax.random.uniform(k6, (1, d_in), jnp.float32, -lim_m, lim_m)
    out_m = jax.block_until_ready(
        shared_qk_mhsa(x, wqv, bqv, wo_m, bo_m,
                       num_heads=num_heads, merge_type="mean"))
    ref_m = _reference(x, wqv, bqv, wo_m, bo_m,
                       num_heads=num_heads, merge_type="mean")
    assert out_m.shape == (batch, seq, d_in)
    assert jnp.allclose(out_m, ref_m, atol=1e-3, rtol=1e-3), "mean mismatch"

    print("KERNEL_OK")
</pallas_src>

<mosaic_0001>
module attributes {stable_mosaic.version = 11 : i64} {
  func.func @_shared_qk_head_kernel(%arg0: i32, %arg1: i32, %arg2: memref<1x8x32xf32, #tpu.memory_space<vmem>>, %arg3: memref<1x32x8xf32, #tpu.memory_space<vmem>>, %arg4: memref<1x1x8xf32, #tpu.memory_space<vmem>>, %arg5: memref<1x32x8xf32, #tpu.memory_space<vmem>>, %arg6: memref<1x1x8xf32, #tpu.memory_space<vmem>>, %arg7: memref<1x8x32xf32, #tpu.memory_space<vmem>>, %arg8: memref<1x32xf32, #tpu.memory_space<vmem>>, %arg9: memref<1x8x32xf32, #tpu.memory_space<vmem>>, %arg10: memref<8x32xf32, #tpu.memory_space<vmem>>) attributes {dimension_semantics = [#tpu.dimension_semantics<parallel>, #tpu.dimension_semantics<arbitrary>], iteration_bounds = array<i64: 2, 4>, scalar_prefetch = 0 : i64, scratch_operands = 1 : i64, tpu.core_type = #tpu.core_type<tc>, window_params = [{transform_indices = @transform_0, window_bounds = array<i64: 1, 8, 32>}, {transform_indices = @transform_1, window_bounds = array<i64: 1, 32, 8>}, {transform_indices = @transform_2, window_bounds = array<i64: 1, 1, 8>}, {transform_indices = @transform_3, window_bounds = array<i64: 1, 32, 8>}, {transform_indices = @transform_4, window_bounds = array<i64: 1, 1, 8>}, {transform_indices = @transform_5, window_bounds = array<i64: 1, 8, 32>}, {pipeline_mode = #tpu.pipeline_mode<synchronous>, transform_indices = @transform_6, window_bounds = array<i64: 1, 32>}, {transform_indices = @transform_7, window_bounds = array<i64: 1, 8, 32>}]} {
    %c0 = arith.constant 0 : index
    %c0_0 = arith.constant 0 : index
    %c0_1 = arith.constant 0 : index
    %0 = vector.load %arg2[%c0, %c0_0, %c0_1] : memref<1x8x32xf32, #tpu.memory_space<vmem>>, vector<1x8x32xf32>
    %1 = vector.shape_cast %0 : vector<1x8x32xf32> to vector<8x32xf32>
    %c0_2 = arith.constant 0 : index
    %c0_3 = arith.constant 0 : index
    %c0_4 = arith.constant 0 : index
    %2 = vector.load %arg3[%c0_2, %c0_3, %c0_4] : memref<1x32x8xf32, #tpu.memory_space<vmem>>, vector<1x32x8xf32>
    %3 = vector.shape_cast %2 : vector<1x32x8xf32> to vector<32x8xf32>
    %cst = arith.constant dense<0.000000e+00> : vector<8x8xf32>
    %4 = tpu.matmul %1, %3, %cst {dimension_numbers = #tpu.dot_dimension_numbers<[1], [0], [0], [1], [0, 0, 1, 1], [], []>} : vector<8x32xf32>, vector<32x8xf32>, vector<8x8xf32> -> vector<8x8xf32>
    %c0_5 = arith.constant 0 : index
    %c0_6 = arith.constant 0 : index
    %c0_7 = arith.constant 0 : index
    %5 = vector.load %arg4[%c0_5, %c0_6, %c0_7] : memref<1x1x8xf32, #tpu.memory_space<vmem>>, vector<1x1x8xf32>
    %6 = vector.shape_cast %5 : vector<1x1x8xf32> to vector<1x8xf32>
    %7 = vector.broadcast %6 : vector<1x8xf32> to vector<8x8xf32>
    %8 = arith.addf %4, %7 : vector<8x8xf32>
    %c0_8 = arith.constant 0 : index
    %c0_9 = arith.constant 0 : index
    %c0_10 = arith.constant 0 : index
    %9 = vector.load %arg5[%c0_8, %c0_9, %c0_10] : memref<1x32x8xf32, #tpu.memory_space<vmem>>, vector<1x32x8xf32>
    %10 = vector.shape_cast %9 : vector<1x32x8xf32> to vector<32x8xf32>
    %cst_11 = arith.constant dense<0.000000e+00> : vector<8x8xf32>
    %11 = tpu.matmul %1, %10, %cst_11 {dimension_numbers = #tpu.dot_dimension_numbers<[1], [0], [0], [1], [0, 0, 1, 1], [], []>} : vector<8x32xf32>, vector<32x8xf32>, vector<8x8xf32> -> vector<8x8xf32>
    %c0_12 = arith.constant 0 : index
    %c0_13 = arith.constant 0 : index
    %c0_14 = arith.constant 0 : index
    %12 = vector.load %arg6[%c0_12, %c0_13, %c0_14] : memref<1x1x8xf32, #tpu.memory_space<vmem>>, vector<1x1x8xf32>
    %13 = vector.shape_cast %12 : vector<1x1x8xf32> to vector<1x8xf32>
    %14 = vector.broadcast %13 : vector<1x8xf32> to vector<8x8xf32>
    %15 = arith.addf %11, %14 : vector<8x8xf32>
    %cst_15 = arith.constant dense<0.000000e+00> : vector<8x8xf32>
    %16 = tpu.matmul %8, %8, %cst_15 {dimension_numbers = #tpu.dot_dimension_numbers<[1], [1], [0], [0], [0, 0, 1, 0], [], []>} : vector<8x8xf32>, vector<8x8xf32>, vector<8x8xf32> -> vector<8x8xf32>
    %cst_16 = arith.constant dense<0xFF800000> : vector<8xf32>
    %17 = vector.multi_reduction <maximumf>, %16, %cst_16 [1] : vector<8x8xf32> to vector<8xf32>
    %18 = vector.shape_cast %17 : vector<8xf32> to vector<8x1xf32>
    %19 = vector.broadcast %18 : vector<8x1xf32> to vector<8x8xf32>
    %20 = arith.subf %16, %19 : vector<8x8xf32>
    %21 = math.exp %20 : vector<8x8xf32>
    %cst_17 = arith.constant dense<0.000000e+00> : vector<8xf32>
    %22 = vector.multi_reduction <add>, %21, %cst_17 [1] : vector<8x8xf32> to vector<8xf32>
    %23 = vector.shape_cast %22 : vector<8xf32> to vector<8x1xf32>
    %cst_18 = arith.constant dense<0.000000e+00> : vector<8x8xf32>
    %24 = tpu.matmul %21, %15, %cst_18 {dimension_numbers = #tpu.dot_dimension_numbers<[1], [0], [0], [1], [0, 0, 1, 1], [], []>} : vector<8x8xf32>, vector<8x8xf32>, vector<8x8xf32> -> vector<8x8xf32>
    %25 = tpu.reciprocal %23 {approx = true} : vector<8x1xf32> -> vector<8x1xf32>
    %26 = arith.mulf %23, %25 : vector<8x1xf32>
    %cst_19 = arith.constant 2.000000e+00 : f32
    %27 = vector.broadcast %cst_19 : f32 to vector<8x1xf32>
    %28 = arith.subf %27, %26 : vector<8x1xf32>
    %29 = arith.mulf %25, %28 : vector<8x1xf32>
    %30 = vector.broadcast %29 : vector<8x1xf32> to vector<8x8xf32>
    %31 = arith.mulf %24, %30 : vector<8x8xf32>
    %c0_20 = arith.constant 0 : index
    %c0_21 = arith.constant 0 : index
    %c0_22 = arith.constant 0 : index
    %32 = vector.load %arg7[%c0_20, %c0_21, %c0_22] : memref<1x8x32xf32, #tpu.memory_space<vmem>>, vector<1x8x32xf32>
    %33 = vector.shape_cast %32 : vector<1x8x32xf32> to vector<8x32xf32>
    %cst_23 = arith.constant dense<0.000000e+00> : vector<8x32xf32>
    %34 = tpu.matmul %31, %33, %cst_23 {dimension_numbers = #tpu.dot_dimension_numbers<[1], [0], [0], [1], [0, 0, 1, 1], [], []>} : vector<8x8xf32>, vector<8x32xf32>, vector<8x32xf32> -> vector<8x32xf32>
    %c0_i32 = arith.constant 0 : i32
    %35 = arith.cmpi eq, %arg1, %c0_i32 : i32
    %36 = arith.extui %35 : i1 to i32
    %c0_i32_24 = arith.constant 0 : i32
    %37 = arith.cmpi ne, %36, %c0_i32_24 : i32
    scf.if %37 {
      %c0_28 = arith.constant 0 : index
      %c0_29 = arith.constant 0 : index
      %44 = vector.load %arg8[%c0_28, %c0_29] : memref<1x32xf32, #tpu.memory_space<vmem>>, vector<1x32xf32>
      %45 = vector.broadcast %44 : vector<1x32xf32> to vector<8x32xf32>
      %46 = arith.addf %34, %45 : vector<8x32xf32>
      %c0_30 = arith.constant 0 : index
      %c0_31 = arith.constant 0 : index
      %47 = vector.load %arg10[%c0_30, %c0_31] : memref<8x32xf32, #tpu.memory_space<vmem>>, vector<8x32xf32>
      tpu.vector_store %arg10[%c0_30, %c0_31], %46 {strides = array<i32>} : memref<8x32xf32, #tpu.memory_space<vmem>>, vector<8x32xf32>,
    } else {
    }
    %c0_i32_25 = arith.constant 0 : i32
    %38 = arith.cmpi ne, %arg1, %c0_i32_25 : i32
    %39 = arith.extui %38 : i1 to i32
    %c0_i32_26 = arith.constant 0 : i32
    %40 = arith.cmpi ne, %39, %c0_i32_26 : i32
    scf.if %40 {
      %c0_28 = arith.constant 0 : index
      %c0_29 = arith.constant 0 : index
      %44 = vector.load %arg10[%c0_28, %c0_29] : memref<8x32xf32, #tpu.memory_space<vmem>>, vector<8x32xf32>
      %45 = arith.addf %44, %34 : vector<8x32xf32>
      %c0_30 = arith.constant 0 : index
      %c0_31 = arith.constant 0 : index
      %46 = vector.load %arg10[%c0_30, %c0_31] : memref<8x32xf32, #tpu.memory_space<vmem>>, vector<8x32xf32>
      tpu.vector_store %arg10[%c0_30, %c0_31], %45 {strides = array<i32>} : memref<8x32xf32, #tpu.memory_space<vmem>>, vector<8x32xf32>,
    } else {
    }
    %c3_i32 = arith.constant 3 : i32
    %41 = arith.cmpi eq, %arg1, %c3_i32 : i32
    %42 = arith.extui %41 : i1 to i32
    %c0_i32_27 = arith.constant 0 : i32
    %43 = arith.cmpi ne, %42, %c0_i32_27 : i32
    scf.if %43 {
      %c0_28 = arith.constant 0 : index
      %c0_29 = arith.constant 0 : index
      %44 = vector.load %arg10[%c0_28, %c0_29] : memref<8x32xf32, #tpu.memory_space<vmem>>, vector<8x32xf32>
      %c0_30 = arith.constant 0 : index
      %c0_31 = arith.constant 0 : index
      %c0_32 = arith.constant 0 : index
      %45 = vector.load %arg9[%c0_30, %c0_31, %c0_32] : memref<1x8x32xf32, #tpu.memory_space<vmem>>, vector<1x8x32xf32>
      %46 = vector.shape_cast %45 : vector<1x8x32xf32> to vector<8x32xf32>
      %47 = vector.shape_cast %44 : vector<8x32xf32> to vector<1x8x32xf32>
      tpu.vector_store %arg9[%c0_30, %c0_31, %c0_32], %47 {strides = array<i32>} : memref<1x8x32xf32, #tpu.memory_space<vmem>>, vector<1x8x32xf32>,
    } else {
    }
    return
  }
  func.func @transform_0(%arg0: i32, %arg1: i32) -> (i32, i32, i32) {
    %c0_i32 = arith.constant 0 : i32
    %c0_i32_0 = arith.constant 0 : i32
    %c0_i32_1 = arith.constant 0 : i32
    return %arg0, %c0_i32, %c0_i32_0 : i32, i32, i32
  }
  func.func @transform_1(%arg0: i32, %arg1: i32) -> (i32, i32, i32) {
    %c0_i32 = arith.constant 0 : i32
    %c0_i32_0 = arith.constant 0 : i32
    %c0_i32_1 = arith.constant 0 : i32
    return %arg1, %c0_i32, %c0_i32_0 : i32, i32, i32
  }
  func.func @transform_2(%arg0: i32, %arg1: i32) -> (i32, i32, i32) {
    %c0_i32 = arith.constant 0 : i32
    %c0_i32_0 = arith.constant 0 : i32
    %c0_i32_1 = arith.constant 0 : i32
    return %arg1, %c0_i32, %c0_i32_0 : i32, i32, i32
  }
  func.func @transform_3(%arg0: i32, %arg1: i32) -> (i32, i32, i32) {
    %c0_i32 = arith.constant 0 : i32
    %c0_i32_0 = arith.constant 0 : i32
    %c0_i32_1 = arith.constant 0 : i32
    return %arg1, %c0_i32, %c0_i32_0 : i32, i32, i32
  }
  func.func @transform_4(%arg0: i32, %arg1: i32) -> (i32, i32, i32) {
    %c0_i32 = arith.constant 0 : i32
    %c0_i32_0 = arith.constant 0 : i32
    %c0_i32_1 = arith.constant 0 : i32
    return %arg1, %c0_i32, %c0_i32_0 : i32, i32, i32
  }
  func.func @transform_5(%arg0: i32, %arg1: i32) -> (i32, i32, i32) {
    %c0_i32 = arith.constant 0 : i32
    %c0_i32_0 = arith.constant 0 : i32
    %c0_i32_1 = arith.constant 0 : i32
    return %arg1, %c0_i32, %c0_i32_0 : i32, i32, i32
  }
  func.func @transform_6(%arg0: i32, %arg1: i32) -> (i32, i32) {
    %c0_i32 = arith.constant 0 : i32
    %c0_i32_0 = arith.constant 0 : i32
    %c0_i32_1 = arith.constant 0 : i32
    return %c0_i32, %c0_i32_0 : i32, i32
  }
  func.func @transform_7(%arg0: i32, %arg1: i32) -> (i32, i32, i32) {
    %c0_i32 = arith.constant 0 : i32
    %c0_i32_0 = arith.constant 0 : i32
    %c0_i32_1 = arith.constant 0 : i32
    return %arg0, %c0_i32, %c0_i32_0 : i32, i32, i32
  }
}

</mosaic_0001>

<llo_original>
// kernel: tpu_custom_call.1
$region0: #{tpu_custom_call.1}
  #allocation0 [shape = 'u32[]', space=smem, size = 0x4, offset = 0x4, fixed_abs, tag = 'smem constant byte address 0x4 - core index']
  #allocation1 [shape = 'u32[144,128]{1,0:T(1,128)}', space=vmem, size = 0x12000, scoped, tag = 'internal scratch']
  #allocation2 [shape = 'f32[8,32]{1,0:T(8,128)}', space=vmem, size = 0x1000, scoped, tag = 'scratch operand']
  %s0 = inlined_call_operand.vmem [shape: f32[2,8,32], index: 0, kind: input, shape index: {}]
  %s1 = inlined_call_operand.vmem [shape: f32[4,32,8], index: 1, kind: input, shape index: {}]
  %s2 = inlined_call_operand.vmem [shape: f32[4,1,8], index: 2, kind: input, shape index: {}]
  %s3 = inlined_call_operand.vmem [shape: f32[4,32,8], index: 3, kind: input, shape index: {}]
  %s4 = inlined_call_operand.vmem [shape: f32[4,1,8], index: 4, kind: input, shape index: {}]
  %s5 = inlined_call_operand.vmem [shape: f32[4,8,32], index: 5, kind: input, shape index: {}]
  %s6 = inlined_call_operand.vmem [shape: f32[1,32], index: 6, kind: input, shape index: {}]
  %s7 = inlined_call_operand.hbm [shape: f32[2,8,32], index: 7, kind: output, shape index: {}]
  %s8 = sld [smem:[#allocation0]]
  $region73: #{tpu_custom_call.1} parent=0
    _
  %s10 = ssub.s32 1, %s8
  %s11 = scalar_select 0, %s10, %s8
  $region1: #{tpu_custom_call.1} parent=0
    #allocation3 [shape = 'u8[8192]{0}', space=vmem, size = 0x2000, scoped, tag = 'output window, operand 0']
    #allocation4 [shape = 's32[2]{0}', space=sflag, size = 0x8, scoped, tag = 'scoped memory for tpu_custom_call.1']
    %12 = vsyncpa [#allocation4], 0
    %s13 = scalar_lea.sflag [#allocation4], 1
    %14 = vsyncpa %s13, 0
    loop: start=0, step=1, limit=10
    $region2: #{tpu_custom_call.1} parent=1 // loop_pre_header
      _
    $region3: #{tpu_custom_call.1} parent=1 // loop_header
      %s16 = sphi 0, %s20
      %p17 = scmp.ge.s32.totalorder %s16, 10
      %s23 = sphi 0, %s35
      %s24 = sphi 0, %s31
      %s25 = sphi 0, %s23
      %s26 = sphi 0, %s24
      %s27 = sphi 0, %s25
      %s28 = sphi 0, %s26
      %s38 = sphi 0, %s40
      %s41 = sphi 0, %s38
      %s42 = sphi 0, %s41
      %s58 = sphi 0, %s42
      %s64 = sphi 0, %s66
      %s67 = sphi 0, %s64
      %s68 = sphi 0, %s67
      %s84 = sphi 0, %s68
      %s90 = sphi 0, %s92
      %s93 = sphi 0, %s90
      %s94 = sphi 0, %s93
      %s110 = sphi 0, %s94
      %s116 = sphi 0, %s118
      %s119 = sphi 0, %s116
      %s120 = sphi 0, %s119
      %s136 = sphi 0, %s120
      %s142 = sphi 0, %s144
      %s145 = sphi 0, %s142
      %s146 = sphi 0, %s145
      %s162 = sphi 0, %s146
      %s168 = sphi 0, %s170
      %s171 = sphi 0, %s168
      %s172 = sphi 0, %s171
      %s188 = sphi 0, %s172
      %s192 = sphi 0, %s192
      %s194 = sphi 0, %s192
      %s195 = sphi 0, %s194
      %s209 = sphi 0, %s195
      %s215 = sphi 0, %s217
      %s218 = sphi 0, %s215
      %s219 = sphi 0, %s218
      %s235 = sphi 0, %s219
    $region4: #{tpu_custom_call.1} parent=1 // loop_header_branch
      %19 = sbr.rel (%p17) target = $region8
    $region5: #{tpu_custom_call.1} parent=1 // loop_body
      %s21 = ssub.s32 %s16, 1
      %s22 = ssub.s32 %s16, 2
      %s29 = sadd.s32 1, %s24
      %p30 = scmp.ge.s32.totalorder %s29, 4
      %s31 = scalar_select %p30, 0, %s29
      %s32 = sadd.s32 1, %s23
      %s33 = scalar_select %p30, %s32, %s23
      %p34 = scmp.ge.s32.totalorder %s33, 2
      %s35 = scalar_select %p34, 0, %s33
      %s36 = ssub.s32 %s23, %s35
      %p37 = scmp.eq.s32.totalorder %s36, 0
      %s39 = sadd.s32 %s38, 1
      %s40 = scalar_select %p37, %s38, %s39
      %p43 = pneg %p37
      %p44 = scmp.eq.s32.totalorder %s16, 7
      %p45 = por %p43, %p44
      %p46 = scmp.ne.s32.totalorder %s38, %s41
      %p47 = scmp.eq.s32.totalorder %s16, 0
      %p48 = por %p46, %p47
      %p49 = scmp.ne.s32.totalorder %s38, %s41
      %p50 = scmp.eq.s32.totalorder %s21, 7
      %p51 = por %p49, %p50
      %p52 = scmp.ne.s32.totalorder %s41, %s42
      %p53 = scmp.eq.s32.totalorder %s21, 0
      %p54 = por %p52, %p53
      %p55 = scmp.ne.s32.totalorder %s41, %s42
      %p56 = scmp.eq.s32.totalorder %s22, 7
      %p57 = por %p55, %p56
      %p59 = scmp.ne.s32.totalorder %s42, %s58
      %p60 = scmp.eq.s32.totalorder %s22, 0
      %p61 = por %p59, %p60
      %s62 = ssub.s32 %s24, %s31
      %p63 = scmp.eq.s32.totalorder %s62, 0
      %s65 = sadd.s32 %s64, 1
      %s66 = scalar_select %p63, %s64, %s65
      %p69 = pneg %p63
      %p70 = scmp.eq.s32.totalorder %s16, 7
      %p71 = por %p69, %p70
      %p72 = scmp.ne.s32.totalorder %s64, %s67
      %p73 = scmp.eq.s32.totalorder %s16, 0
      %p74 = por %p72, %p73
      %p75 = scmp.ne.s32.totalorder %s64, %s67
      %p76 = scmp.eq.s32.totalorder %s21, 7
      %p77 = por %p75, %p76
      %p78 = scmp.ne.s32.totalorder %s67, %s68
      %p79 = scmp.eq.s32.totalorder %s21, 0
      %p80 = por %p78, %p79
      %p81 = scmp.ne.s32.totalorder %s67, %s68
      %p82 = scmp.eq.s32.totalorder %s22, 7
      %p83 = por %p81, %p82
      %p85 = scmp.ne.s32.totalorder %s68, %s84
      %p86 = scmp.eq.s32.totalorder %s22, 0
      %p87 = por %p85, %p86
      %s88 = ssub.s32 %s24, %s31
      %p89 = scmp.eq.s32.totalorder %s88, 0
      %s91 = sadd.s32 %s90, 1
      %s92 = scalar_select %p89, %s90, %s91
      %p95 = pneg %p89
      %p96 = scmp.eq.s32.totalorder %s16, 7
      %p97 = por %p95, %p96
      %p98 = scmp.ne.s32.totalorder %s90, %s93
      %p99 = scmp.eq.s32.totalorder %s16, 0
      %p100 = por %p98, %p99
      %p101 = scmp.ne.s32.totalorder %s90, %s93
      %p102 = scmp.eq.s32.totalorder %s21, 7
      %p103 = por %p101, %p102
      %p104 = scmp.ne.s32.totalorder %s93, %s94
      %p105 = scmp.eq.s32.totalorder %s21, 0
      %p106 = por %p104, %p105
      %p107 = scmp.ne.s32.totalorder %s93, %s94
      %p108 = scmp.eq.s32.totalorder %s22, 7
      %p109 = por %p107, %p108
      %p111 = scmp.ne.s32.totalorder %s94, %s110
      %p112 = scmp.eq.s32.totalorder %s22, 0
      %p113 = por %p111, %p112
      %s114 = ssub.s32 %s24, %s31
      %p115 = scmp.eq.s32.totalorder %s114, 0
      %s117 = sadd.s32 %s116, 1
      %s118 = scalar_select %p115, %s116, %s117
      %p121 = pneg %p115
      %p122 = scmp.eq.s32.totalorder %s16, 7
      %p123 = por %p121, %p122
      %p124 = scmp.ne.s32.totalorder %s116, %s119
      %p125 = scmp.eq.s32.totalorder %s16, 0
      %p126 = por %p124, %p125
      %p127 = scmp.ne.s32.totalorder %s116, %s119
      %p128 = scmp.eq.s32.totalorder %s21, 7
      %p129 = por %p127, %p128
      %p130 = scmp.ne.s32.totalorder %s119, %s120
      %p131 = scmp.eq.s32.totalorder %s21, 0
      %p132 = por %p130, %p131
      %p133 = scmp.ne.s32.totalorder %s119, %s120
      %p134 = scmp.eq.s32.totalorder %s22, 7
      %p135 = por %p133, %p134
      %p137 = scmp.ne.s32.totalorder %s120, %s136
      %p138 = scmp.eq.s32.totalorder %s22, 0
      %p139 = por %p137, %p138
      %s140 = ssub.s32 %s24, %s31
      %p141 = scmp.eq.s32.totalorder %s140, 0
      %s143 = sadd.s32 %s142, 1
      %s144 = scalar_select %p141, %s142, %s143
      %p147 = pneg %p141
      %p148 = scmp.eq.s32.totalorder %s16, 7
      %p149 = por %p147, %p148
      %p150 = scmp.ne.s32.totalorder %s142, %s145
      %p151 = scmp.eq.s32.totalorder %s16, 0
      %p152 = por %p150, %p151
      %p153 = scmp.ne.s32.totalorder %s142, %s145
      %p154 = scmp.eq.s32.totalorder %s21, 7
      %p155 = por %p153, %p154
      %p156 = scmp.ne.s32.totalorder %s145, %s146
      %p157 = scmp.eq.s32.totalorder %s21, 0
      %p158 = por %p156, %p157
      %p159 = scmp.ne.s32.totalorder %s145, %s146
      %p160 = scmp.eq.s32.totalorder %s22, 7
      %p161 = por %p159, %p160
      %p163 = scmp.ne.s32.totalorder %s146, %s162
      %p164 = scmp.eq.s32.totalorder %s22, 0
      %p165 = por %p163, %p164
      %s166 = ssub.s32 %s24, %s31
      %p167 = scmp.eq.s32.totalorder %s166, 0
      %s169 = sadd.s32 %s168, 1
      %s170 = scalar_select %p167, %s168, %s169
      %p173 = pneg %p167
      %p174 = scmp.eq.s32.totalorder %s16, 7
      %p175 = por %p173, %p174
      %p176 = scmp.ne.s32.totalorder %s168, %s171
      %p177 = scmp.eq.s32.totalorder %s16, 0
      %p178 = por %p176, %p177
      %p179 = scmp.ne.s32.totalorder %s168, %s171
      %p180 = scmp.eq.s32.totalorder %s21, 7
      %p181 = por %p179, %p180
      %p182 = scmp.ne.s32.totalorder %s171, %s172
      %p183 = scmp.eq.s32.totalorder %s21, 0
      %p184 = por %p182, %p183
      %p185 = scmp.ne.s32.totalorder %s171, %s172
      %p186 = scmp.eq.s32.totalorder %s22, 7
      %p187 = por %p185, %p186
      %p189 = scmp.ne.s32.totalorder %s172, %s188
      %p190 = scmp.eq.s32.totalorder %s22, 0
      %p191 = por %p189, %p190
      %s193 = sadd.s32 %s192, 1
      %p196 = scmp.eq.s32.totalorder %s16, 7
      %p197 = scmp.ne.s32.totalorder %s192, %s194
      %p198 = scmp.eq.s32.totalorder %s16, 0
      %p199 = por %p197, %p198
      %p200 = scmp.ne.s32.totalorder %s192, %s194
      %p201 = scmp.eq.s32.totalorder %s21, 7
      %p202 = por %p200, %p201
      %p203 = scmp.ne.s32.totalorder %s194, %s195
      %p204 = scmp.eq.s32.totalorder %s21, 0
      %p205 = por %p203, %p204
      %p206 = scmp.ne.s32.totalorder %s194, %s195
      %p207 = scmp.eq.s32.totalorder %s22, 7
      %p208 = por %p206, %p207
      %p210 = scmp.ne.s32.totalorder %s195, %s209
      %p211 = scmp.eq.s32.totalorder %s22, 0
      %p212 = por %p210, %p211
      %s213 = ssub.s32 %s23, %s35
      %p214 = scmp.eq.s32.totalorder %s213, 0
      %s216 = sadd.s32 %s215, 1
      %s217 = scalar_select %p214, %s215, %s216
      %p220 = pneg %p214
      %p221 = scmp.eq.s32.totalorder %s16, 7
      %p222 = por %p220, %p221
      %p223 = scmp.ne.s32.totalorder %s215, %s218
      %p224 = scmp.eq.s32.totalorder %s16, 0
      %p225 = por %p223, %p224
      %p226 = scmp.ne.s32.totalorder %s215, %s218
      %p227 = scmp.eq.s32.totalorder %s21, 7
      %p228 = por %p226, %p227
      %p229 = scmp.ne.s32.totalorder %s218, %s219
      %p230 = scmp.eq.s32.totalorder %s21, 0
      %p231 = por %p229, %p230
      %p232 = scmp.ne.s32.totalorder %s218, %s219
      %p233 = scmp.eq.s32.totalorder %s22, 7
      %p234 = por %p232, %p233
      %p236 = scmp.ne.s32.totalorder %s219, %s235
      %p237 = scmp.eq.s32.totalorder %s22, 0
      %p238 = por %p236, %p237
      %p239 = scmp.le.s32.totalorder 1, %s16
      %p240 = scmp.lt.s32.totalorder %s16, 9
      %p241 = pnand %p239, %p240
      %p242 = pneg %p241
      // Predicated region
      $region9: #{tpu_custom_call.1} parent=5 // pred_check
        _
      $region10: #{tpu_custom_call.1} parent=5 // pred_check_branch
        %244 = sbr.rel (%p241) target = $region12
      $region11: #{tpu_custom_call.1} parent=5 // pred_region
        %s245 = ssub.s32 %s16, 1
        // Predicated region
        $region13: #{tpu_custom_call.1} parent=11 // pred_check
          %p246 = pneg %p205
        $region14: #{tpu_custom_call.1} parent=11 // pred_check_branch
          %248 = sbr.rel (%p246) target = $region16
        $region15: #{tpu_custom_call.1} parent=11 // pred_region
          _
        $region16: #{tpu_custom_call.1} parent=11 // pred_fallthru
          _
      $region12: #{tpu_custom_call.1} parent=5 // pred_fallthru
        _
      %p249 = scmp.lt.s32.totalorder %s16, 8
      // Predicated region
      $region17: #{tpu_custom_call.1} parent=5 // pred_check
        %p250 = pneg %p249
      $region18: #{tpu_custom_call.1} parent=5 // pred_check_branch
        %252 = sbr.rel (%p250) target = $region20
      $region19: #{tpu_custom_call.1} parent=5 // pred_region
        // Predicated region
        $region21: #{tpu_custom_call.1} parent=19 // pred_check
          %p253 = pneg %p48
        $region22: #{tpu_custom_call.1} parent=19 // pred_check_branch
          %255 = sbr.rel (%p253) target = $region24
        $region23: #{tpu_custom_call.1} parent=19 // pred_region
          %p256 = scmp.lt.s32.totalorder %s23, 1
          %s257 = scalar_select %p256, %s23, 1
          %s258 = smul.addr %s257, 8
          %s259 = scalar_lea.vmem %s0, %s258
        $region24: #{tpu_custom_call.1} parent=19 // pred_fallthru
          _
        // Predicated region
        $region25: #{tpu_custom_call.1} parent=19 // pred_check
          %p260 = pneg %p74
        $region26: #{tpu_custom_call.1} parent=19 // pred_check_branch
          %262 = sbr.rel (%p260) target = $region28
        $region27: #{tpu_custom_call.1} parent=19 // pred_region
          %p263 = scmp.lt.s32.totalorder %s24, 3
          %s264 = scalar_select %p263, %s24, 3
          %s265 = smul.addr %s264, 4
          %s266 = smul.addr %s265, 8
          %s267 = scalar_lea.vmem %s1, %s266
        $region28: #{tpu_custom_call.1} parent=19 // pred_fallthru
          _
        // Predicated region
        $region29: #{tpu_custom_call.1} parent=19 // pred_check
          %p268 = pneg %p100
        $region30: #{tpu_custom_call.1} parent=19 // pred_check_branch
          %270 = sbr.rel (%p268) target = $region32
        $region31: #{tpu_custom_call.1} parent=19 // pred_region
          %p271 = scmp.lt.s32.totalorder %s24, 3
          %s272 = scalar_select %p271, %s24, 3
          %s273 = scalar_lea.vmem %s2, %s272
        $region32: #{tpu_custom_call.1} parent=19 // pred_fallthru
          _
        // Predicated region
        $region33: #{tpu_custom_call.1} parent=19 // pred_check
          %p274 = pneg %p126
        $region34: #{tpu_custom_call.1} parent=19 // pred_check_branch
          %276 = sbr.rel (%p274) target = $region36
        $region35: #{tpu_custom_call.1} parent=19 // pred_region
          %p277 = scmp.lt.s32.totalorder %s24, 3
          %s278 = scalar_select %p277, %s24, 3
          %s279 = smul.addr %s278, 4
          %s280 = smul.addr %s279, 8
          %s281 = scalar_lea.vmem %s3, %s280
        $region36: #{tpu_custom_call.1} parent=19 // pred_fallthru
          _
        // Predicated region
        $region37: #{tpu_custom_call.1} parent=19 // pred_check
          %p282 = pneg %p152
        $region38: #{tpu_custom_call.1} parent=19 // pred_check_branch
          %284 = sbr.rel (%p282) target = $region40
        $region39: #{tpu_custom_call.1} parent=19 // pred_region
          %p285 = scmp.lt.s32.totalorder %s24, 3
          %s286 = scalar_select %p285, %s24, 3
          %s287 = scalar_lea.vmem %s4, %s286
        $region40: #{tpu_custom_call.1} parent=19 // pred_fallthru
          _
        // Predicated region
        $region41: #{tpu_custom_call.1} parent=19 // pred_check
          %p288 = pneg %p178
        $region42: #{tpu_custom_call.1} parent=19 // pred_check_branch
          %290 = sbr.rel (%p288) target = $region44
        $region43: #{tpu_custom_call.1} parent=19 // pred_region
          %p291 = scmp.lt.s32.totalorder %s24, 3
          %s292 = scalar_select %p291, %s24, 3
          %s293 = smul.addr %s292, 8
          %s294 = scalar_lea.vmem %s5, %s293
        $region44: #{tpu_custom_call.1} parent=19 // pred_fallthru
          _
      $region20: #{tpu_custom_call.1} parent=5 // pred_fallthru
        _
      %p295 = scmp.le.s32.totalorder 1, %s16
      %p296 = scmp.lt.s32.totalorder %s16, 9
      %p297 = pnand %p295, %p296
      %p298 = pneg %p297
      // Predicated region
      $region45: #{tpu_custom_call.1} parent=5 // pred_check
        _
      $region46: #{tpu_custom_call.1} parent=5 // pred_check_branch
        %300 = sbr.rel (%p297) target = $region48
      $region47: #{tpu_custom_call.1} parent=5 // pred_region
        %s301 = ssub.s32 %s16, 1
        %p302 = scmp.lt.s32.totalorder %s25, 1
        %s303 = scalar_select %p302, %s25, 1
        %s304 = smul.addr %s303, 8
        %s305 = scalar_lea.vmem %s0, %s304
        %p306 = pneg %p54
        %p307 = pneg %p51
        %p308 = scmp.lt.s32.totalorder %s26, 3
        %s309 = scalar_select %p308, %s26, 3
        %s310 = smul.addr %s309, 4
        %s311 = smul.addr %s310, 8
        %s312 = scalar_lea.vmem %s1, %s311
        %p313 = pneg %p80
        %p314 = pneg %p77
        %p315 = scmp.lt.s32.totalorder %s26, 3
        %s316 = scalar_select %p315, %s26, 3
        %s317 = scalar_lea.vmem %s2, %s316
        %p318 = pneg %p106
        %p319 = pneg %p103
        %p320 = scmp.lt.s32.totalorder %s26, 3
        %s321 = scalar_select %p320, %s26, 3
        %s322 = smul.addr %s321, 4
        %s323 = smul.addr %s322, 8
        %s324 = scalar_lea.vmem %s3, %s323
        %p325 = pneg %p132
        %p326 = pneg %p129
        %p327 = scmp.lt.s32.totalorder %s26, 3
        %s328 = scalar_select %p327, %s26, 3
        %s329 = scalar_lea.vmem %s4, %s328
        %p330 = pneg %p158
        %p331 = pneg %p155
        %p332 = scmp.lt.s32.totalorder %s26, 3
        %s333 = scalar_select %p332, %s26, 3
        %s334 = smul.addr %s333, 8
        %s335 = scalar_lea.vmem %s5, %s334
        %p336 = pneg %p184
        %p337 = pneg %p181
        %p338 = pneg %p205
        %p339 = pneg %p202
        %p340 = pneg %p231
        %p341 = pneg %p228
        %s342 = sand.u32 %s218, 1
        %s343 = scalar_lea.sflag [#allocation4], %s342
        %s344 = sand.u32 %s218, 1
        %s345 = smul.addr %s344, 8
        %s346 = scalar_lea.vmem [#allocation3], %s345
        %p347 = scmp.lt.s32.totalorder %s25, 1
        %s348 = scalar_select %p347, %s25, 1
        %s349 = smul.addr %s348, 8
        %s350 = scalar_lea.vmem %s0, %s349
        %p351 = scmp.lt.s32.totalorder %s26, 3
        %s352 = scalar_select %p351, %s26, 3
        %s353 = smul.addr %s352, 4
        %s354 = smul.addr %s353, 8
        %s355 = scalar_lea.vmem %s1, %s354
        %p356 = scmp.lt.s32.totalorder %s26, 3
        %s357 = scalar_select %p356, %s26, 3
        %s358 = scalar_lea.vmem %s2, %s357
        %p359 = scmp.lt.s32.totalorder %s26, 3
        %s360 = scalar_select %p359, %s26, 3
        %s361 = smul.addr %s360, 4
        %s362 = smul.addr %s361, 8
        %s363 = scalar_lea.vmem %s3, %s362
        %p364 = scmp.lt.s32.totalorder %s26, 3
        %s365 = scalar_select %p364, %s26, 3
        %s366 = scalar_lea.vmem %s4, %s365
        %p367 = scmp.lt.s32.totalorder %s26, 3
        %s368 = scalar_select %p367, %s26, 3
        %s369 = smul.addr %s368, 8
        %s370 = scalar_lea.vmem %s5, %s369
        %v371 = vld [vmem:[%s350] sm:$0xff]
        %v372 = vld [vmem:[%s355] sm:$0xff]
        %v373 = vld [vmem:[%s355 + $0x8] sm:$0xff]
        %v374 = vld [vmem:[%s355 + $0x10] sm:$0xff]
        %v375 = vld [vmem:[%s355 + $0x18] sm:$0xff]
        %v376 = vld [vmem:[%s358] sm:$0x1]
        %v378 = vlaneseq
        %v379 = vshrl.u32 %v378, 7
        %v380 = vsub.s32 0, %v379
        %v381 = vrot.slane %v376, %v380
        %vm383 = vcmask 261120
        %v385 = vsel %vm383, %v371, 0
        %387 = vmatprep.subr.mxu0 0.0
        %388 = vmatpush1.msra.mxu0 0.0
        %389 = vmatprep.subr.mxu0 0.0
        %390 = vmatpush1.msra.mxu0 0.0
        %391 = vmatprep.subr.mxu0 0.0
        %392 = vmatpush1.msra.mxu0 0.0
        %393 = vmatprep.subr.mxu0 0.0
        %394 = vmatpush1.msra.mxu0 0.0
        %395 = vmatprep.subr.mxu0 0.0
        %396 = vmatpush1.msra.mxu0 0.0
        %397 = vmatprep.subr.mxu0 0.0
        %398 = vmatpush1.msra.mxu0 0.0
        %399 = vmatprep.subr.mxu0 0.0
        %400 = vmatpush1.msra.mxu0 0.0
        %401 = vmatprep.subr.mxu0 0.0
        %402 = vmatpush1.msra.mxu0 0.0
        %403 = vmatprep.subr.mxu0 0.0
        %404 = vmatpush1.msra.mxu0 0.0
        %405 = vmatprep.subr.mxu0 0.0
        %406 = vmatpush1.msra.mxu0 0.0
        %407 = vmatprep.subr.mxu0 0.0
        %408 = vmatpush1.msra.mxu0 0.0
        %409 = vmatprep.subr.mxu0 0.0
        %410 = vmatpush1.msra.mxu0 0.0
        %411 = vmatprep.subr.mxu0 0.0
        %412 = vmatpush1.msra.mxu0 %v375
        %413 = vmatprep.subr.mxu0 0.0
        %414 = vmatpush1.msra.mxu0 %v374
        %415 = vmatprep.subr.mxu0 0.0
        %416 = vmatpush1.msra.mxu0 %v373
        %417 = vmatprep.subr.mxu0 0.0
        %418 = vmatpush1.msra.mxu0 %v372
        %419 = vmatprep.subr.mxu0 0.0
        %420 = vmatpush2.msra.mxu0 0.0
        %421 = vmatprep.subr.mxu0 0.0
        %422 = vmatpush2.msra.mxu0 0.0
        %423 = vmatprep.subr.mxu0 0.0
        %424 = vmatpush2.msra.mxu0 0.0
        %425 = vmatprep.subr.mxu0 0.0
        %426 = vmatpush2.msra.mxu0 0.0
        %427 = vmatprep.subr.mxu0 0.0
        %428 = vmatpush2.msra.mxu0 0.0
        %429 = vmatprep.subr.mxu0 0.0
        %430 = vmatpush2.msra.mxu0 0.0
        %431 = vmatprep.subr.mxu0 0.0
        %432 = vmatpush2.msra.mxu0 0.0
        %433 = vmatprep.subr.mxu0 0.0
        %434 = vmatpush2.msra.mxu0 0.0
        %435 = vmatprep.subr.mxu0 0.0
        %436 = vmatpush2.msra.mxu0 0.0
        %437 = vmatprep.subr.mxu0 0.0
        %438 = vmatpush2.msra.mxu0 0.0
        %439 = vmatprep.subr.mxu0 0.0
        %440 = vmatpush2.msra.mxu0 0.0
        %441 = vmatprep.subr.mxu0 0.0
        %442 = vmatpush2.msra.mxu0 0.0
        %443 = vmatprep.subr.mxu0 0.0
        %444 = vmatpush2.msra.mxu0 0.0
        %445 = vmatprep.subr.mxu0 0.0
        %446 = vmatpush2.msra.mxu0 0.0
        %447 = vmatprep.subr.mxu0 0.0
        %448 = vmatpush2.msra.mxu0 0.0
        %449 = vmatprep.subr.mxu0 0.0
        %450 = vmatpush2.msra.mxu0 0.0
        %451 = vmatprep.mubr.f32.mxu0 0.0
        %452 = vmatmul.mubr.f32.gmra.mxu0 %v385
        %v453 = vpop.f32.mrf.mxu0
        %v454 = vadd.f32 %v381, %v453
        %v455 = vpop.f32.mrf.mxu0
        %456 = vdwg.mxu0
        %v457 = vld [vmem:[%s363] sm:$0xff]
        %v458 = vld [vmem:[%s363 + $0x8] sm:$0xff]
        %v459 = vld [vmem:[%s363 + $0x10] sm:$0xff]
        %v460 = vld [vmem:[%s363 + $0x18] sm:$0xff]
        %v461 = vld [vmem:[%s366] sm:$0x1]
        %v463 = vlaneseq
        %v464 = vshrl.u32 %v463, 7
        %v465 = vsub.s32 0, %v464
        %v466 = vrot.slane %v461, %v465
        %468 = vmatprep.subr.mxu0 0.0
        %469 = vmatpush1.msra.mxu0 0.0
        %470 = vmatprep.subr.mxu0 0.0
        %471 = vmatpush1.msra.mxu0 0.0
        %472 = vmatprep.subr.mxu0 0.0
        %473 = vmatpush1.msra.mxu0 0.0
        %474 = vmatprep.subr.mxu0 0.0
        %475 = vmatpush1.msra.mxu0 0.0
        %476 = vmatprep.subr.mxu0 0.0
        %477 = vmatpush1.msra.mxu0 0.0
        %478 = vmatprep.subr.mxu0 0.0
        %479 = vmatpush1.msra.mxu0 0.0
        %480 = vmatprep.subr.mxu0 0.0
        %481 = vmatpush1.msra.mxu0 0.0
        %482 = vmatprep.subr.mxu0 0.0
        %483 = vmatpush1.msra.mxu0 0.0
        %484 = vmatprep.subr.mxu0 0.0
        %485 = vmatpush1.msra.mxu0 0.0
        %486 = vmatprep.subr.mxu0 0.0
        %487 = vmatpush1.msra.mxu0 0.0
        %488 = vmatprep.subr.mxu0 0.0
        %489 = vmatpush1.msra.mxu0 0.0
        %490 = vmatprep.subr.mxu0 0.0
        %491 = vmatpush1.msra.mxu0 0.0
        %492 = vmatprep.subr.mxu0 0.0
        %493 = vmatpush1.msra.mxu0 %v460
        %494 = vmatprep.subr.mxu0 0.0
        %495 = vmatpush1.msra.mxu0 %v459
        %496 = vmatprep.subr.mxu0 0.0
        %497 = vmatpush1.msra.mxu0 %v458
        %498 = vmatprep.subr.mxu0 0.0
        %499 = vmatpush1.msra.mxu0 %v457
        %500 = vmatprep.subr.mxu0 0.0
        %501 = vmatpush2.msra.mxu0 0.0
        %502 = vmatprep.subr.mxu0 0.0
        %503 = vmatpush2.msra.mxu0 0.0
        %504 = vmatprep.subr.mxu0 0.0
        %505 = vmatpush2.msra.mxu0 0.0
        %506 = vmatprep.subr.mxu0 0.0
        %507 = vmatpush2.msra.mxu0 0.0
        %508 = vmatprep.subr.mxu0 0.0
        %509 = vmatpush2.msra.mxu0 0.0
        %510 = vmatprep.subr.mxu0 0.0
        %511 = vmatpush2.msra.mxu0 0.0
        %512 = vmatprep.subr.mxu0 0.0
        %513 = vmatpush2.msra.mxu0 0.0
        %514 = vmatprep.subr.mxu0 0.0
        %515 = vmatpush2.msra.mxu0 0.0
        %516 = vmatprep.subr.mxu0 0.0
        %517 = vmatpush2.msra.mxu0 0.0
        %518 = vmatprep.subr.mxu0 0.0
        %519 = vmatpush2.msra.mxu0 0.0
        %520 = vmatprep.subr.mxu0 0.0
        %521 = vmatpush2.msra.mxu0 0.0
        %522 = vmatprep.subr.mxu0 0.0
        %523 = vmatpush2.msra.mxu0 0.0
        %524 = vmatprep.subr.mxu0 0.0
        %525 = vmatpush2.msra.mxu0 0.0
        %526 = vmatprep.subr.mxu0 0.0
        %527 = vmatpush2.msra.mxu0 0.0
        %528 = vmatprep.subr.mxu0 0.0
        %529 = vmatpush2.msra.mxu0 0.0
        %530 = vmatprep.subr.mxu0 0.0
        %531 = vmatpush2.msra.mxu0 0.0
        %532 = vmatprep.mubr.f32.mxu0 0.0
        %533 = vmatmul.mubr.f32.gmra.mxu0 %v385
        %v534 = vpop.f32.mrf.mxu0
        %v535 = vadd.f32 %v466, %v534
        %v536 = vpop.f32.mrf.mxu0
        %537 = vdwg.mxu0
        %vm538 = vcmask 64512
        %v540 = vsel %vm538, %v454, 0
        %542 = vmatprep.subr.mxu0 0.0
        %543 = vmatpush1.xpose.msra.mxu0 0.0
        %544 = vmatprep.subr.mxu0 0.0
        %545 = vmatpush1.xpose.msra.mxu0 0.0
        %546 = vmatprep.subr.mxu0 0.0
        %547 = vmatpush1.xpose.msra.mxu0 0.0
        %548 = vmatprep.subr.mxu0 0.0
        %549 = vmatpush1.xpose.msra.mxu0 0.0
        %550 = vmatprep.subr.mxu0 0.0
        %551 = vmatpush1.xpose.msra.mxu0 0.0
        %552 = vmatprep.subr.mxu0 0.0
        %553 = vmatpush1.xpose.msra.mxu0 0.0
        %554 = vmatprep.subr.mxu0 0.0
        %555 = vmatpush1.xpose.msra.mxu0 0.0
        %556 = vmatprep.subr.mxu0 0.0
        %557 = vmatpush1.xpose.msra.mxu0 0.0
        %558 = vmatprep.subr.mxu0 0.0
        %559 = vmatpush1.xpose.msra.mxu0 0.0
        %560 = vmatprep.subr.mxu0 0.0
        %561 = vmatpush1.xpose.msra.mxu0 0.0
        %562 = vmatprep.subr.mxu0 0.0
        %563 = vmatpush1.xpose.msra.mxu0 0.0
        %564 = vmatprep.subr.mxu0 0.0
        %565 = vmatpush1.xpose.msra.mxu0 0.0
        %566 = vmatprep.subr.mxu0 0.0
        %567 = vmatpush1.xpose.msra.mxu0 0.0
        %568 = vmatprep.subr.mxu0 0.0
        %569 = vmatpush1.xpose.msra.mxu0 0.0
        %570 = vmatprep.subr.mxu0 0.0
        %571 = vmatpush1.xpose.msra.mxu0 0.0
        %572 = vmatprep.subr.mxu0 0.0
        %573 = vmatpush1.xpose.msra.mxu0 %v540
        %574 = vmatprep.subr.mxu0 0.0
        %575 = vmatpush2.xpose.msra.mxu0 0.0
        %576 = vmatprep.subr.mxu0 0.0
        %577 = vmatpush2.xpose.msra.mxu0 0.0
        %578 = vmatprep.subr.mxu0 0.0
        %579 = vmatpush2.xpose.msra.mxu0 0.0
        %580 = vmatprep.subr.mxu0 0.0
        %581 = vmatpush2.xpose.msra.mxu0 0.0
        %582 = vmatprep.subr.mxu0 0.0
        %583 = vmatpush2.xpose.msra.mxu0 0.0
        %584 = vmatprep.subr.mxu0 0.0
        %585 = vmatpush2.xpose.msra.mxu0 0.0
        %586 = vmatprep.subr.mxu0 0.0
        %587 = vmatpush2.xpose.msra.mxu0 0.0
        %588 = vmatprep.subr.mxu0 0.0
        %589 = vmatpush2.xpose.msra.mxu0 0.0
        %590 = vmatprep.subr.mxu0 0.0
        %591 = vmatpush2.xpose.msra.mxu0 0.0
        %592 = vmatprep.subr.mxu0 0.0
        %593 = vmatpush2.xpose.msra.mxu0 0.0
        %594 = vmatprep.subr.mxu0 0.0
        %595 = vmatpush2.xpose.msra.mxu0 0.0
        %596 = vmatprep.subr.mxu0 0.0
        %597 = vmatpush2.xpose.msra.mxu0 0.0
        %598 = vmatprep.subr.mxu0 0.0
        %599 = vmatpush2.xpose.msra.mxu0 0.0
        %600 = vmatprep.subr.mxu0 0.0
        %601 = vmatpush2.xpose.msra.mxu0 0.0
        %602 = vmatprep.subr.mxu0 0.0
        %603 = vmatpush2.xpose.msra.mxu0 0.0
        %604 = vmatprep.subr.mxu0 0.0
        %605 = vmatpush2.xpose.msra.mxu0 0.0
        %606 = vmatprep.mubr.f32.mxu0 0.0
        %607 = vmatmul.mubr.f32.gmra.mxu0 %v540
        %v608 = vpop.f32.mrf.mxu0
        %v609 = vadd.f32 0.0, %v608
        %v610 = vpop.f32.mrf.mxu0
        %611 = vdwg.mxu0
        %v612 = vsel %vm538, %v609, -inf
        %613 = vmax.xlane.f32.xlu0 %v612
        %v614 = vpop.xlane.xlu0 %613
        %v615 = vsub.f32 %v609, %v614
        %v616 = vmul.f32 %v615, 1.442695
        %v617 = vpow.pop %v616
        %v618 = vsel %vm538, %v617, 0.0
        %619 = vadd.xlane.f32.xlu0 %v618
        %v620 = vpop.xlane.xlu0 %619
        %v622 = vsel %vm538, %v617, 0
        %624 = vmatprep.subr.mxu0 0.0
        %625 = vmatpush1.msra.mxu0 0.0
        %626 = vmatprep.subr.mxu0 0.0
        %627 = vmatpush1.msra.mxu0 0.0
        %628 = vmatprep.subr.mxu0 0.0
        %629 = vmatpush1.msra.mxu0 0.0
        %630 = vmatprep.subr.mxu0 0.0
        %631 = vmatpush1.msra.mxu0 0.0
        %632 = vmatprep.subr.mxu0 0.0
        %633 = vmatpush1.msra.mxu0 0.0
        %634 = vmatprep.subr.mxu0 0.0
        %635 = vmatpush1.msra.mxu0 0.0
        %636 = vmatprep.subr.mxu0 0.0
        %637 = vmatpush1.msra.mxu0 0.0
        %638 = vmatprep.subr.mxu0 0.0
        %639 = vmatpush1.msra.mxu0 0.0
        %640 = vmatprep.subr.mxu0 0.0
        %641 = vmatpush1.msra.mxu0 0.0
        %642 = vmatprep.subr.mxu0 0.0
        %643 = vmatpush1.msra.mxu0 0.0
        %644 = vmatprep.subr.mxu0 0.0
        %645 = vmatpush1.msra.mxu0 0.0
        %646 = vmatprep.subr.mxu0 0.0
        %647 = vmatpush1.msra.mxu0 0.0
        %648 = vmatprep.subr.mxu0 0.0
        %649 = vmatpush1.msra.mxu0 0.0
        %650 = vmatprep.subr.mxu0 0.0
        %651 = vmatpush1.msra.mxu0 0.0
        %652 = vmatprep.subr.mxu0 0.0
        %653 = vmatpush1.msra.mxu0 0.0
        %654 = vmatprep.subr.mxu0 0.0
        %655 = vmatpush1.msra.mxu0 %v535
        %656 = vmatprep.subr.mxu0 0.0
        %657 = vmatpush2.msra.mxu0 0.0
        %658 = vmatprep.subr.mxu0 0.0
        %659 = vmatpush2.msra.mxu0 0.0
        %660 = vmatprep.subr.mxu0 0.0
        %661 = vmatpush2.msra.mxu0 0.0
        %662 = vmatprep.subr.mxu0 0.0
        %663 = vmatpush2.msra.mxu0 0.0
        %664 = vmatprep.subr.mxu0 0.0
        %665 = vmatpush2.msra.mxu0 0.0
        %666 = vmatprep.subr.mxu0 0.0
        %667 = vmatpush2.msra.mxu0 0.0
        %668 = vmatprep.subr.mxu0 0.0
        %669 = vmatpush2.msra.mxu0 0.0
        %670 = vmatprep.subr.mxu0 0.0
        %671 = vmatpush2.msra.mxu0 0.0
        %672 = vmatprep.subr.mxu0 0.0
        %673 = vmatpush2.msra.mxu0 0.0
        %674 = vmatprep.subr.mxu0 0.0
        %675 = vmatpush2.msra.mxu0 0.0
        %676 = vmatprep.subr.mxu0 0.0
        %677 = vmatpush2.msra.mxu0 0.0
        %678 = vmatprep.subr.mxu0 0.0
        %679 = vmatpush2.msra.mxu0 0.0
        %680 = vmatprep.subr.mxu0 0.0
        %681 = vmatpush2.msra.mxu0 0.0
        %682 = vmatprep.subr.mxu0 0.0
        %683 = vmatpush2.msra.mxu0 0.0
        %684 = vmatprep.subr.mxu0 0.0
        %685 = vmatpush2.msra.mxu0 0.0
        %686 = vmatprep.subr.mxu0 0.0
        %687 = vmatpush2.msra.mxu0 0.0
        %688 = vmatprep.mubr.f32.mxu0 0.0
        %689 = vmatmul.mubr.f32.gmra.mxu0 %v622
        %v690 = vpop.f32.mrf.mxu0
        %v691 = vadd.f32 0.0, %v690
        %v692 = vpop.f32.mrf.mxu0
        %693 = vdwg.mxu0
        %v694 = vrcp.pop %v620
        %v695 = vmul.f32 %v620, %v694
        %v696 = vsub.f32 2.0, %v695
        %v697 = vmul.f32 %v694, %v696
        %v698 = vmul.f32 %v691, %v697
        %v699 = vld [vmem:[%s370] sm:$0xff]
        %v701 = vsel %vm538, %v698, 0
        %703 = vmatprep.subr.mxu0 0.0
        %704 = vmatpush1.msra.mxu0 0.0
        %705 = vmatprep.subr.mxu0 0.0
        %706 = vmatpush1.msra.mxu0 0.0
        %707 = vmatprep.subr.mxu0 0.0
        %708 = vmatpush1.msra.mxu0 0.0
        %709 = vmatprep.subr.mxu0 0.0
        %710 = vmatpush1.msra.mxu0 0.0
        %711 = vmatprep.subr.mxu0 0.0
        %712 = vmatpush1.msra.mxu0 0.0
        %713 = vmatprep.subr.mxu0 0.0
        %714 = vmatpush1.msra.mxu0 0.0
        %715 = vmatprep.subr.mxu0 0.0
        %716 = vmatpush1.msra.mxu0 0.0
        %717 = vmatprep.subr.mxu0 0.0
        %718 = vmatpush1.msra.mxu0 0.0
        %719 = vmatprep.subr.mxu0 0.0
        %720 = vmatpush1.msra.mxu0 0.0
        %721 = vmatprep.subr.mxu0 0.0
        %722 = vmatpush1.msra.mxu0 0.0
        %723 = vmatprep.subr.mxu0 0.0
        %724 = vmatpush1.msra.mxu0 0.0
        %725 = vmatprep.subr.mxu0 0.0
        %726 = vmatpush1.msra.mxu0 0.0
        %727 = vmatprep.subr.mxu0 0.0
        %728 = vmatpush1.msra.mxu0 0.0
        %729 = vmatprep.subr.mxu0 0.0
        %730 = vmatpush1.msra.mxu0 0.0
        %731 = vmatprep.subr.mxu0 0.0
        %732 = vmatpush1.msra.mxu0 0.0
        %733 = vmatprep.subr.mxu0 0.0
        %734 = vmatpush1.msra.mxu0 %v699
        %735 = vmatprep.subr.mxu0 0.0
        %736 = vmatpush2.msra.mxu0 0.0
        %737 = vmatprep.subr.mxu0 0.0
        %738 = vmatpush2.msra.mxu0 0.0
        %739 = vmatprep.subr.mxu0 0.0
        %740 = vmatpush2.msra.mxu0 0.0
        %741 = vmatprep.subr.mxu0 0.0
        %742 = vmatpush2.msra.mxu0 0.0
        %743 = vmatprep.subr.mxu0 0.0
        %744 = vmatpush2.msra.mxu0 0.0
        %745 = vmatprep.subr.mxu0 0.0
        %746 = vmatpush2.msra.mxu0 0.0
        %747 = vmatprep.subr.mxu0 0.0
        %748 = vmatpush2.msra.mxu0 0.0
        %749 = vmatprep.subr.mxu0 0.0
        %750 = vmatpush2.msra.mxu0 0.0
        %751 = vmatprep.subr.mxu0 0.0
        %752 = vmatpush2.msra.mxu0 0.0
        %753 = vmatprep.subr.mxu0 0.0
        %754 = vmatpush2.msra.mxu0 0.0
        %755 = vmatprep.subr.mxu0 0.0
        %756 = vmatpush2.msra.mxu0 0.0
        %757 = vmatprep.subr.mxu0 0.0
        %758 = vmatpush2.msra.mxu0 0.0
        %759 = vmatprep.subr.mxu0 0.0
        %760 = vmatpush2.msra.mxu0 0.0
        %761 = vmatprep.subr.mxu0 0.0
        %762 = vmatpush2.msra.mxu0 0.0
        %763 = vmatprep.subr.mxu0 0.0
        %764 = vmatpush2.msra.mxu0 0.0
        %765 = vmatprep.subr.mxu0 0.0
        %766 = vmatpush2.msra.mxu0 0.0
        %767 = vmatprep.mubr.f32.mxu0 0.0
        %768 = vmatmul.mubr.f32.gmra.mxu0 %v701
        %v769 = vpop.f32.mrf.mxu0
        %v770 = vadd.f32 0.0, %v769
        %v771 = vpop.f32.mrf.mxu0
        %772 = vdwg.mxu0
        %p773 = scmp.eq.s32.totalorder %s26, 0
        // Predicated region
        $region49: #{tpu_custom_call.1} parent=47 // pred_check
          %p774 = pneg %p773
        $region50: #{tpu_custom_call.1} parent=47 // pred_check_branch
          %776 = sbr.rel (%p774) target = $region52
        $region51: #{tpu_custom_call.1} parent=47 // pred_region
          %v777 = vld [vmem:[%s6] sm:$0x1]
          %v779 = vlaneseq
          %v780 = vshrl.u32 %v779, 7
          %v781 = vsub.s32 0, %v780
          %v782 = vrot.slane %v777, %v781
          %v784 = vadd.f32 %v770, %v782
          %785 = vst.msk [vmem:[#allocation2] sm:$0xff] %vm383, %v784
        $region52: #{tpu_custom_call.1} parent=47 // pred_fallthru
          _
        %p786 = scmp.ne.s32.totalorder %s26, 0
        // Predicated region
        $region53: #{tpu_custom_call.1} parent=47 // pred_check
          %p787 = pneg %p786
        $region54: #{tpu_custom_call.1} parent=47 // pred_check_branch
          %789 = sbr.rel (%p787) target = $region56
        $region55: #{tpu_custom_call.1} parent=47 // pred_region
          %v790 = vld [vmem:[#allocation2] sm:$0xff]
          %v791 = vadd.f32 %v790, %v770
          %792 = vst.msk [vmem:[#allocation2] sm:$0xff] %vm383, %v791
        $region56: #{tpu_custom_call.1} parent=47 // pred_fallthru
          _
        %p793 = scmp.eq.s32.totalorder %s26, 3
        // Predicated region
        $region57: #{tpu_custom_call.1} parent=47 // pred_check
          %p794 = pneg %p793
        $region58: #{tpu_custom_call.1} parent=47 // pred_check_branch
          %796 = sbr.rel (%p794) target = $region60
        $region59: #{tpu_custom_call.1} parent=47 // pred_region
          %v797 = vld [vmem:[#allocation2] sm:$0xff]
          %798 = vst.msk [vmem:[%s346] sm:$0xff] %vm383, %v797
        $region60: #{tpu_custom_call.1} parent=47 // pred_fallthru
          _
        %s799 = sand.u32 %s218, 1
        %s800 = scalar_lea.sflag [#allocation4], %s799
        %s801 = sand.u32 %s218, 1
        %s802 = smul.addr %s801, 8
        %s803 = scalar_lea.vmem [#allocation3], %s802
        // Predicated region
        $region61: #{tpu_custom_call.1} parent=47 // pred_check
          %p804 = pneg %p228
        $region62: #{tpu_custom_call.1} parent=47 // pred_check_branch
          %806 = sbr.rel (%p804) target = $region64
        $region63: #{tpu_custom_call.1} parent=47 // pred_region
          %s808 = ssub.s32 128, 128
          %809 = vsyncadd %s800, %s808
          %s810 = smul.addr %s25, 128
          %s811 = scalar_lea.hbm %s7, %s810
          %s813 = sshll.u32 %s803, 4
          %s814 = int_to_ptr.vmem [resolvable:$true] %s813
          %816 = dma.vmem_to_hbm [thread:$0]  %s814, 128, %s811, %s800
        $region64: #{tpu_custom_call.1} parent=47 // pred_fallthru
          _
      $region48: #{tpu_custom_call.1} parent=5 // pred_fallthru
        _
      %p817 = scmp.le.s32.totalorder 2, %s16
      // Predicated region
      $region65: #{tpu_custom_call.1} parent=5 // pred_check
        %p818 = pneg %p817
      $region66: #{tpu_custom_call.1} parent=5 // pred_check_branch
        %820 = sbr.rel (%p818) target = $region68
      $region67: #{tpu_custom_call.1} parent=5 // pred_region
        %s821 = ssub.s32 %s16, 2
        // Predicated region
        $region69: #{tpu_custom_call.1} parent=67 // pred_check
          %p822 = pneg %p234
        $region70: #{tpu_custom_call.1} parent=67 // pred_check_branch
          %824 = sbr.rel (%p822) target = $region72
        $region71: #{tpu_custom_call.1} parent=67 // pred_region
          %s825 = sand.u32 %s219, 1
          %s826 = scalar_lea.sflag [#allocation4], %s825
          %s827 = sand.u32 %s219, 1
          %s828 = smul.addr %s827, 8
          %s829 = scalar_lea.vmem [#allocation3], %s828
          %830 = dma.done %s826, 128
        $region72: #{tpu_custom_call.1} parent=67 // pred_fallthru
          _
      $region68: #{tpu_custom_call.1} parent=5 // pred_fallthru
        _
    $region6: #{tpu_custom_call.1} parent=1 // loop_footer
      %s20 = sadd.s32 1, %s16
    $region7: #{tpu_custom_call.1} parent=1 // loop_footer_branch
      %15 = sbr.rel target = $region3
    $region8: #{tpu_custom_call.1} parent=1 // loop_exit
      _
    %831 = vsyncpa [#allocation4], 1
    %s832 = scalar_lea.sflag [#allocation4], 1
    %833 = vsyncpa %s832, 1

</llo_original>
